<compile_context>
chip_gen: v5e
topology: v5e:2x2
jax: 0.10.0
libtpu: 0.0.40
codegen_flags: <defaults>
</compile_context>

<pallas_src>
import jax
import jax.numpy as jnp
from jax import lax
from jax.experimental import pallas as pl
from jax.experimental.pallas import tpu as pltpu


def _preact_convx2_kernel(x_ref, b1_ref, b2_ref, s1_ref, t1_ref, s2_ref, t2_ref,
                          o_ref):
    # x_ref:  (B, H, W*Ci)   B = batch block, lane-fused (W, C) -> W*C layout
    # b1_ref: (3*W*Ci, W*Co) kh-stacked banded conv1 weights (kw taps + W pad baked in)
    # b2_ref: (3*W*Co, W*Co) kh-stacked banded conv2 weights
    # s*/t*:  (1, W*C)       folded eval-mode BN scale / shift, lane layout
    # o_ref:  (B, H, W*Co)
    B, H, WCi = x_ref.shape
    WCo = o_ref.shape[2]
    mm_dtype = b1_ref.dtype                      # bf16 (or f32) matmul operands

    def conv3x3(a_f32, b_ref, wc):
        # 'same' 3x3 conv as matmul(s): kw taps and W zero-padding are baked into
        # the banded weights; only a 1-row H halo is added here, per batch element
        # (f32 data movement; cast to the MXU dtype once, right before the dot).
        zr = jnp.zeros((B, 1, wc), jnp.float32)
        ap = jnp.concatenate([zr, a_f32, zr], axis=1)             # (B, H+2, wc)
        taps = [ap[:, kh:kh + H, :].reshape(B * H, wc) for kh in range(3)]
        if wc % 128 == 0:
            # Lane-tile aligned: fuse the 3 kh taps into one K = 3*wc MXU pass
            # (hardware accumulation instead of 3 pops + 2 VPU adds).
            stacked = jnp.concatenate(taps, axis=-1).astype(mm_dtype)
            y = jnp.dot(stacked, b_ref[...], preferred_element_type=jnp.float32)
        else:
            # Unaligned K blocks (e.g. W*Ci = 64): three accumulating dots,
            # first dot initializes the accumulator (no wasted zero-init add).
            y = jnp.dot(taps[0].astype(mm_dtype), b_ref[pl.ds(0, wc), :],
                        preferred_element_type=jnp.float32)
            for kh in range(1, 3):
                y += jnp.dot(taps[kh].astype(mm_dtype),
                             b_ref[pl.ds(kh * wc, wc), :],
                             preferred_element_type=jnp.float32)
        return y.reshape(B, H, WCo)                               # f32

    # ---- BN1 (eval-mode affine) + ReLU, f32 on the VPU ----
    x = x_ref[...].astype(jnp.float32)                            # (B, H, W*Ci)
    a1 = jnp.maximum(x * s1_ref[...] + t1_ref[...], 0.0)
    y1 = conv3x3(a1, b1_ref, WCi)                                 # (B, H, W*Co)

    # ---- BN2 + ReLU + conv2 ----
    a2 = jnp.maximum(y1 * s2_ref[...] + t2_ref[...], 0.0)
    y2 = conv3x3(a2, b2_ref, WCo)                                 # (B, H, W*Co)

    o_ref[...] = y2.astype(o_ref.dtype)                           # 128-lane dense store


def _banded_weights(w_hwio, width, dtype):
    """(3, 3, Ci, Co) HWIO conv weights -> (3*W*Ci, W*Co) kh-stacked banded matrix.

    B[kh*W*Ci + wi*Ci + ci, wo*Co + co] = w[kh, wi - wo + 1, ci, co] when the kw
    tap is in range, else 0.  Out-of-image wi rows never appear, implementing
    zero 'same' padding along W for free.
    """
    kh, kw, ci, co = w_hwio.shape
    wi = jnp.arange(width)[None, :, None]
    wo = jnp.arange(width)[None, None, :]
    k = jnp.arange(kw)[:, None, None]
    mask = (wi == wo + k - 1).astype(w_hwio.dtype)                 # (3, W, W)
    b = jnp.einsum('kio,hkcd->hicod', mask, w_hwio)                # (3, W, Ci, W, Co)
    return b.reshape(kh * width * ci, width * co).astype(dtype)


def _pick_batch_block(n, h, target_m=256):
    """Largest divisor of n with block*h <= target_m, keeping >=2 grid steps."""
    best = 1
    for b in range(1, n + 1):
        if n % b == 0 and b * h <= target_m:
            best = b
    # Keep the grid length a multiple of 2 when possible so v7x can shard the
    # batch axis over its two TensorCores.
    if n // best == 1 and best % 2 == 0:
        best //= 2
    return best


def preact_convx2_fused(x_fused, b1, b2, s1, t1, s2, t2, *, out_dtype=None,
                        block_b=None):
    """x_fused: (N, H, W*Ci).  Returns (N, H, W*Co) in out_dtype."""
    N, H, WCi = x_fused.shape
    WCo = b1.shape[-1]
    if out_dtype is None:
        out_dtype = x_fused.dtype
    if block_b is None:
        block_b = _pick_batch_block(N, H)
    assert N % block_b == 0, (N, block_b)
    grid_len = N // block_b

    out_itemsize = jnp.dtype(out_dtype).itemsize
    flops = 2 * N * H * (3 * WCi * WCo + 3 * WCo * WCo)
    const_bytes = (b1.size * b1.dtype.itemsize + b2.size * b2.dtype.itemsize
                   + (s1.size + t1.size + s2.size + t2.size) * 4)
    bytes_accessed = (x_fused.size * x_fused.dtype.itemsize
                      + N * H * WCo * out_itemsize + const_bytes)

    # Explicit VMEM budget (v7x: 64 MiB physical, half of v5e/v6e): double-
    # buffered activation blocks + resident weights + generous headroom for
    # in-kernel temporaries.  Never below the 32 MiB default scoped limit.
    in_blk = block_b * H * WCi * x_fused.dtype.itemsize
    out_blk = block_b * H * WCo * out_itemsize
    vmem_limit = int(min(64 << 20,
                         max(32 << 20, 8 * (in_blk + out_blk) + 4 * const_bytes)))

    return pl.pallas_call(
        _preact_convx2_kernel,
        out_shape=jax.ShapeDtypeStruct((N, H, WCo), out_dtype),
        grid_spec=pltpu.PrefetchScalarGridSpec(
            num_scalar_prefetch=0,
            grid=(grid_len,),
            in_specs=[
                pl.BlockSpec((block_b, H, WCi), lambda n: (n, 0, 0)),
                # Constant block index across all grid steps -> kept VMEM-resident
                # (not re-DMA'd per batch block).
                pl.BlockSpec((3 * WCi, WCo), lambda n: (0, 0)),
                pl.BlockSpec((3 * WCo, WCo), lambda n: (0, 0)),
                pl.BlockSpec((1, WCi), lambda n: (0, 0)),
                pl.BlockSpec((1, WCi), lambda n: (0, 0)),
                pl.BlockSpec((1, WCo), lambda n: (0, 0)),
                pl.BlockSpec((1, WCo), lambda n: (0, 0)),
            ],
            out_specs=pl.BlockSpec((block_b, H, WCo), lambda n: (n, 0, 0)),
        ),
        compiler_params=pltpu.CompilerParams(
            dimension_semantics=("parallel",),      # v7x: shard batch blocks over 2 TCs
            vmem_limit_bytes=vmem_limit),
        cost_estimate=pl.CostEstimate(flops=flops, transcendentals=0,
                                      bytes_accessed=bytes_accessed),
    )(x_fused, b1, b2, s1, t1, s2, t2)


def preact_convx2_nchw(x_nchw, w1_oihw, w2_oihw,
                       g1, be1, m1, v1, g2, be2, m2, v2,
                       eps=1e-5, matmul_dtype=jnp.bfloat16, act_dtype=jnp.bfloat16):
    """PyTorch-facing wrapper: NCHW in/out (f32), OIHW weights, BN(eval) params."""
    N, Ci, H, W = x_nchw.shape
    Co = w1_oihw.shape[0]

    # Fold eval-mode BN into per-channel scale/shift, pre-tiled once to the
    # lane-fused (W*C) layout (avoids repeated broadcast_in_dim in the kernel).
    s1 = g1 / jnp.sqrt(v1 + eps)
    t1 = be1 - m1 * s1
    s2 = g2 / jnp.sqrt(v2 + eps)
    t2 = be2 - m2 * s2
    s1 = jnp.tile(s1, W).reshape(1, W * Ci)
    t1 = jnp.tile(t1, W).reshape(1, W * Ci)
    s2 = jnp.tile(s2, W).reshape(1, W * Co)
    t2 = jnp.tile(t2, W).reshape(1, W * Co)

    # TODO(synk): for stacked PreactConvx2 blocks, keep this lane-fused
    # (N, H, W*C) layout between layers and drop the NCHW<->fused transposes
    # (pure layout plumbing that can cost more than the kernel itself).
    x_fused = (jnp.transpose(x_nchw, (0, 2, 3, 1))
               .reshape(N, H, W * Ci).astype(act_dtype))
    b1 = _banded_weights(jnp.transpose(w1_oihw, (2, 3, 1, 0)), W, matmul_dtype)
    b2 = _banded_weights(jnp.transpose(w2_oihw, (2, 3, 1, 0)), W, matmul_dtype)

    y = preact_convx2_fused(x_fused, b1, b2, s1, t1, s2, t2, out_dtype=act_dtype)
    y = y.astype(jnp.float32)
    return jnp.transpose(y.reshape(N, H, W, Co), (0, 3, 1, 2))     # -> NCHW


def _reference_nhwc(x, w1_hwio, w2_hwio, s1, b1, s2, b2):
    a1 = jnp.maximum(x * s1 + b1, 0.0)
    y1 = lax.conv_general_dilated(a1, w1_hwio, (1, 1), ((1, 1), (1, 1)),
                                  dimension_numbers=('NHWC', 'HWIO', 'NHWC'))
    a2 = jnp.maximum(y1 * s2 + b2, 0.0)
    y2 = lax.conv_general_dilated(a2, w2_hwio, (1, 1), ((1, 1), (1, 1)),
                                  dimension_numbers=('NHWC', 'HWIO', 'NHWC'))
    return y2


if __name__ == "__main__":
    # Module config: PreactConvx2(c_in=4, c_out=8, bn=True, padding_mode='zeros')
    N, C_in, C_out, H, W = 2, 4, 8, 16, 16
    eps = 1e-5

    key = jax.random.PRNGKey(0)
    keys = jax.random.split(key, 12)

    x_nchw = jax.random.normal(keys[0], (N, C_in, H, W), jnp.float32)

    # Deterministic parameter init (PyTorch-like kaiming-uniform bounds).
    bound1 = 1.0 / (C_in * 9) ** 0.5
    bound2 = 1.0 / (C_out * 9) ** 0.5
    w1_oihw = jax.random.uniform(keys[1], (C_out, C_in, 3, 3), jnp.float32,
                                 -bound1, bound1)
    w2_oihw = jax.random.uniform(keys[2], (C_out, C_out, 3, 3), jnp.float32,
                                 -bound2, bound2)

    g1 = 1.0 + 0.1 * jax.random.normal(keys[3], (C_in,), jnp.float32)
    be1 = 0.1 * jax.random.normal(keys[4], (C_in,), jnp.float32)
    m1 = 0.1 * jax.random.normal(keys[5], (C_in,), jnp.float32)
    v1 = jnp.abs(jax.random.normal(keys[6], (C_in,), jnp.float32)) + 0.5
    g2 = 1.0 + 0.1 * jax.random.normal(keys[7], (C_out,), jnp.float32)
    be2 = 0.1 * jax.random.normal(keys[8], (C_out,), jnp.float32)
    m2 = 0.1 * jax.random.normal(keys[9], (C_out,), jnp.float32)
    v2 = jnp.abs(jax.random.normal(keys[10], (C_out,), jnp.float32)) + 0.5

    # Production path: bf16 activations + bf16 MXU operands, f32 accumulation.
    out_bf16 = preact_convx2_nchw(x_nchw, w1_oihw, w2_oihw,
                                  g1, be1, m1, v1, g2, be2, m2, v2, eps,
                                  matmul_dtype=jnp.bfloat16, act_dtype=jnp.bfloat16)
    # Verification path: full f32 (tight check of the banded-matmul structure).
    out_f32 = preact_convx2_nchw(x_nchw, w1_oihw, w2_oihw,
                                 g1, be1, m1, v1, g2, be2, m2, v2, eps,
                                 matmul_dtype=jnp.float32, act_dtype=jnp.float32)
    out_bf16, out_f32 = jax.block_until_ready((out_bf16, out_f32))
    assert out_bf16.shape == (N, C_out, H, W), out_bf16.shape

    # Cross-check against an XLA conv reference (f32).
    s1r = (g1 / jnp.sqrt(v1 + eps)).reshape(1, 1, 1, -1)
    b1r = (be1.reshape(1, 1, 1, -1) - m1.reshape(1, 1, 1, -1) * s1r)
    s2r = (g2 / jnp.sqrt(v2 + eps)).reshape(1, 1, 1, -1)
    b2r = (be2.reshape(1, 1, 1, -1) - m2.reshape(1, 1, 1, -1) * s2r)
    ref = _reference_nhwc(jnp.transpose(x_nchw, (0, 2, 3, 1)),
                          jnp.transpose(w1_oihw, (2, 3, 1, 0)),
                          jnp.transpose(w2_oihw, (2, 3, 1, 0)),
                          s1r, b1r, s2r, b2r)
    ref = jnp.transpose(ref, (0, 3, 1, 2))

    # f32 path: tight check of the banded-matmul / kh-fusion structure.
    assert jnp.allclose(out_f32, ref, atol=1e-4, rtol=1e-4), \
        float(jnp.max(jnp.abs(out_f32 - ref)))
    # bf16 path: loosened tolerance (bf16 input, operands and output; f32 accumulate).
    assert jnp.allclose(out_bf16, ref, atol=6e-2, rtol=6e-2), \
        float(jnp.max(jnp.abs(out_bf16 - ref)))

    # Larger batch: exercises batch-packed M (block_b > 1, flattened (B*H, K) dots).
    N2 = 8
    x2 = jax.random.normal(keys[11], (N2, C_in, H, W), jnp.float32)
    out2 = preact_convx2_nchw(x2, w1_oihw, w2_oihw,
                              g1, be1, m1, v1, g2, be2, m2, v2, eps,
                              matmul_dtype=jnp.bfloat16, act_dtype=jnp.bfloat16)
    out2 = jax.block_until_ready(out2)
    ref2 = _reference_nhwc(jnp.transpose(x2, (0, 2, 3, 1)),
                           jnp.transpose(w1_oihw, (2, 3, 1, 0)),
                           jnp.transpose(w2_oihw, (2, 3, 1, 0)),
                           s1r, b1r, s2r, b2r)
    ref2 = jnp.transpose(ref2, (0, 3, 1, 2))
    assert jnp.allclose(out2, ref2, atol=6e-2, rtol=6e-2), \
        float(jnp.max(jnp.abs(out2 - ref2)))

    print("KERNEL_OK")
</pallas_src>

<mosaic_0001>
module attributes {stable_mosaic.version = 11 : i64} {
  func.func @_preact_convx2_kernel(%arg0: i32, %arg1: memref<1x16x64xbf16, #tpu.memory_space<vmem>>, %arg2: memref<192x128xbf16, #tpu.memory_space<vmem>>, %arg3: memref<384x128xbf16, #tpu.memory_space<vmem>>, %arg4: memref<1x64xf32, #tpu.memory_space<vmem>>, %arg5: memref<1x64xf32, #tpu.memory_space<vmem>>, %arg6: memref<1x128xf32, #tpu.memory_space<vmem>>, %arg7: memref<1x128xf32, #tpu.memory_space<vmem>>, %arg8: memref<1x16x128xbf16, #tpu.memory_space<vmem>>) attributes {dimension_semantics = [#tpu.dimension_semantics<parallel>], iteration_bounds = array<i64: 2>, scalar_prefetch = 0 : i64, scratch_operands = 0 : i64, tpu.core_type = #tpu.core_type<tc>, window_params = [{transform_indices = @transform_0, window_bounds = array<i64: 1, 16, 64>}, {pipeline_mode = #tpu.pipeline_mode<synchronous>, transform_indices = @transform_1, window_bounds = array<i64: 192, 128>}, {pipeline_mode = #tpu.pipeline_mode<synchronous>, transform_indices = @transform_2, window_bounds = array<i64: 384, 128>}, {pipeline_mode = #tpu.pipeline_mode<synchronous>, transform_indices = @transform_3, window_bounds = array<i64: 1, 64>}, {pipeline_mode = #tpu.pipeline_mode<synchronous>, transform_indices = @transform_4, window_bounds = array<i64: 1, 64>}, {pipeline_mode = #tpu.pipeline_mode<synchronous>, transform_indices = @transform_5, window_bounds = array<i64: 1, 128>}, {pipeline_mode = #tpu.pipeline_mode<synchronous>, transform_indices = @transform_6, window_bounds = array<i64: 1, 128>}, {transform_indices = @transform_7, window_bounds = array<i64: 1, 16, 128>}]} {
    %c0 = arith.constant 0 : index
    %c0_0 = arith.constant 0 : index
    %c0_1 = arith.constant 0 : index
    %0 = vector.load %arg1[%c0, %c0_0, %c0_1] : memref<1x16x64xbf16, #tpu.memory_space<vmem>>, vector<1x16x64xbf16>
    %1 = arith.extf %0 : vector<1x16x64xbf16> to vector<1x16x64xf32>
    %c0_2 = arith.constant 0 : index
    %c0_3 = arith.constant 0 : index
    %2 = vector.load %arg4[%c0_2, %c0_3] : memref<1x64xf32, #tpu.memory_space<vmem>>, vector<1x64xf32>
    %3 = vector.shape_cast %2 : vector<1x64xf32> to vector<1x1x64xf32>
    %4 = vector.broadcast %3 : vector<1x1x64xf32> to vector<1x16x64xf32>
    %5 = arith.mulf %1, %4 : vector<1x16x64xf32>
    %c0_4 = arith.constant 0 : index
    %c0_5 = arith.constant 0 : index
    %6 = vector.load %arg5[%c0_4, %c0_5] : memref<1x64xf32, #tpu.memory_space<vmem>>, vector<1x64xf32>
    %7 = vector.shape_cast %6 : vector<1x64xf32> to vector<1x1x64xf32>
    %8 = vector.broadcast %7 : vector<1x1x64xf32> to vector<1x16x64xf32>
    %9 = arith.addf %5, %8 : vector<1x16x64xf32>
    %cst = arith.constant 0.000000e+00 : f32
    %10 = vector.broadcast %cst : f32 to vector<1x16x64xf32>
    %11 = arith.maximumf %9, %10 : vector<1x16x64xf32>
    %cst_6 = arith.constant 0.000000e+00 : f32
    %12 = vector.broadcast %cst_6 : f32 to vector<1x1x64xf32>
    %13 = tpu.concatenate %12, %11, %12 in 1 : vector<1x1x64xf32>, vector<1x16x64xf32>, vector<1x1x64xf32> -> vector<1x18x64xf32>
    %14 = vector.extract_strided_slice %13 {offsets = [0, 0, 0], sizes = [1, 16, 64], strides = [1, 1, 1]} : vector<1x18x64xf32> to vector<1x16x64xf32>
    %15 = vector.shape_cast %14 : vector<1x16x64xf32> to vector<16x64xf32>
    %16 = vector.extract_strided_slice %13 {offsets = [0, 1, 0], sizes = [1, 16, 64], strides = [1, 1, 1]} : vector<1x18x64xf32> to vector<1x16x64xf32>
    %17 = vector.shape_cast %16 : vector<1x16x64xf32> to vector<16x64xf32>
    %18 = vector.extract_strided_slice %13 {offsets = [0, 2, 0], sizes = [1, 16, 64], strides = [1, 1, 1]} : vector<1x18x64xf32> to vector<1x16x64xf32>
    %19 = vector.shape_cast %18 : vector<1x16x64xf32> to vector<16x64xf32>
    %20 = arith.truncf %15 : vector<16x64xf32> to vector<16x64xbf16>
    %c0_7 = arith.constant 0 : index
    %c0_8 = arith.constant 0 : index
    %21 = vector.load %arg2[%c0_7, %c0_8] : memref<192x128xbf16, #tpu.memory_space<vmem>>, vector<64x128xbf16>
    %cst_9 = arith.constant dense<0.000000e+00> : vector<16x128xf32>
    %22 = tpu.matmul %20, %21, %cst_9 {dimension_numbers = #tpu.dot_dimension_numbers<[1], [0], [0], [1], [0, 0, 1, 1], [], []>} : vector<16x64xbf16>, vector<64x128xbf16>, vector<16x128xf32> -> vector<16x128xf32>
    %23 = arith.truncf %17 : vector<16x64xf32> to vector<16x64xbf16>
    %c64 = arith.constant 64 : index
    %c0_10 = arith.constant 0 : index
    %24 = vector.load %arg2[%c64, %c0_10] : memref<192x128xbf16, #tpu.memory_space<vmem>>, vector<64x128xbf16>
    %cst_11 = arith.constant dense<0.000000e+00> : vector<16x128xf32>
    %25 = tpu.matmul %23, %24, %cst_11 {dimension_numbers = #tpu.dot_dimension_numbers<[1], [0], [0], [1], [0, 0, 1, 1], [], []>} : vector<16x64xbf16>, vector<64x128xbf16>, vector<16x128xf32> -> vector<16x128xf32>
    %26 = arith.addf %22, %25 : vector<16x128xf32>
    %27 = arith.truncf %19 : vector<16x64xf32> to vector<16x64xbf16>
    %c128 = arith.constant 128 : index
    %c0_12 = arith.constant 0 : index
    %28 = vector.load %arg2[%c128, %c0_12] : memref<192x128xbf16, #tpu.memory_space<vmem>>, vector<64x128xbf16>
    %cst_13 = arith.constant dense<0.000000e+00> : vector<16x128xf32>
    %29 = tpu.matmul %27, %28, %cst_13 {dimension_numbers = #tpu.dot_dimension_numbers<[1], [0], [0], [1], [0, 0, 1, 1], [], []>} : vector<16x64xbf16>, vector<64x128xbf16>, vector<16x128xf32> -> vector<16x128xf32>
    %30 = arith.addf %26, %29 : vector<16x128xf32>
    %31 = vector.shape_cast %30 : vector<16x128xf32> to vector<1x16x128xf32>
    %c0_14 = arith.constant 0 : index
    %c0_15 = arith.constant 0 : index
    %32 = vector.load %arg6[%c0_14, %c0_15] : memref<1x128xf32, #tpu.memory_space<vmem>>, vector<1x128xf32>
    %33 = vector.shape_cast %32 : vector<1x128xf32> to vector<1x1x128xf32>
    %34 = vector.broadcast %33 : vector<1x1x128xf32> to vector<1x16x128xf32>
    %35 = arith.mulf %31, %34 : vector<1x16x128xf32>
    %c0_16 = arith.constant 0 : index
    %c0_17 = arith.constant 0 : index
    %36 = vector.load %arg7[%c0_16, %c0_17] : memref<1x128xf32, #tpu.memory_space<vmem>>, vector<1x128xf32>
    %37 = vector.shape_cast %36 : vector<1x128xf32> to vector<1x1x128xf32>
    %38 = vector.broadcast %37 : vector<1x1x128xf32> to vector<1x16x128xf32>
    %39 = arith.addf %35, %38 : vector<1x16x128xf32>
    %cst_18 = arith.constant 0.000000e+00 : f32
    %40 = vector.broadcast %cst_18 : f32 to vector<1x16x128xf32>
    %41 = arith.maximumf %39, %40 : vector<1x16x128xf32>
    %cst_19 = arith.constant 0.000000e+00 : f32
    %42 = vector.broadcast %cst_19 : f32 to vector<1x1x128xf32>
    %43 = tpu.concatenate %42, %41, %42 in 1 : vector<1x1x128xf32>, vector<1x16x128xf32>, vector<1x1x128xf32> -> vector<1x18x128xf32>
    %44 = vector.extract_strided_slice %43 {offsets = [0, 0, 0], sizes = [1, 16, 128], strides = [1, 1, 1]} : vector<1x18x128xf32> to vector<1x16x128xf32>
    %45 = vector.shape_cast %44 : vector<1x16x128xf32> to vector<16x128xf32>
    %46 = vector.extract_strided_slice %43 {offsets = [0, 1, 0], sizes = [1, 16, 128], strides = [1, 1, 1]} : vector<1x18x128xf32> to vector<1x16x128xf32>
    %47 = vector.shape_cast %46 : vector<1x16x128xf32> to vector<16x128xf32>
    %48 = vector.extract_strided_slice %43 {offsets = [0, 2, 0], sizes = [1, 16, 128], strides = [1, 1, 1]} : vector<1x18x128xf32> to vector<1x16x128xf32>
    %49 = vector.shape_cast %48 : vector<1x16x128xf32> to vector<16x128xf32>
    %50 = tpu.concatenate %45, %47, %49 in 1 : vector<16x128xf32>, vector<16x128xf32>, vector<16x128xf32> -> vector<16x384xf32>
    %51 = arith.truncf %50 : vector<16x384xf32> to vector<16x384xbf16>
    %c0_20 = arith.constant 0 : index
    %c0_21 = arith.constant 0 : index
    %52 = vector.load %arg3[%c0_20, %c0_21] : memref<384x128xbf16, #tpu.memory_space<vmem>>, vector<384x128xbf16>
    %cst_22 = arith.constant dense<0.000000e+00> : vector<16x128xf32>
    %53 = tpu.matmul %51, %52, %cst_22 {dimension_numbers = #tpu.dot_dimension_numbers<[1], [0], [0], [1], [0, 0, 1, 1], [], []>} : vector<16x384xbf16>, vector<384x128xbf16>, vector<16x128xf32> -> vector<16x128xf32>
    %54 = vector.shape_cast %53 : vector<16x128xf32> to vector<1x16x128xf32>
    %55 = arith.truncf %54 : vector<1x16x128xf32> to vector<1x16x128xbf16>
    %c0_23 = arith.constant 0 : index
    %c0_24 = arith.constant 0 : index
    %c0_25 = arith.constant 0 : index
    %56 = vector.load %arg8[%c0_23, %c0_24, %c0_25] : memref<1x16x128xbf16, #tpu.memory_space<vmem>>, vector<1x16x128xbf16>
    tpu.vector_store %arg8[%c0_23, %c0_24, %c0_25], %55 {strides = array<i32>} : memref<1x16x128xbf16, #tpu.memory_space<vmem>>, vector<1x16x128xbf16>,
    return
  }
  func.func @transform_0(%arg0: i32) -> (i32, i32, i32) {
    %c0_i32 = arith.constant 0 : i32
    %c0_i32_0 = arith.constant 0 : i32
    %c0_i32_1 = arith.constant 0 : i32
    return %arg0, %c0_i32, %c0_i32_0 : i32, i32, i32
  }
  func.func @transform_1(%arg0: i32) -> (i32, i32) {
    %c0_i32 = arith.constant 0 : i32
    %c0_i32_0 = arith.constant 0 : i32
    %c0_i32_1 = arith.constant 0 : i32
    return %c0_i32, %c0_i32_0 : i32, i32
  }
  func.func @transform_2(%arg0: i32) -> (i32, i32) {
    %c0_i32 = arith.constant 0 : i32
    %c0_i32_0 = arith.constant 0 : i32
    %c0_i32_1 = arith.constant 0 : i32
    return %c0_i32, %c0_i32_0 : i32, i32
  }
  func.func @transform_3(%arg0: i32) -> (i32, i32) {
    %c0_i32 = arith.constant 0 : i32
    %c0_i32_0 = arith.constant 0 : i32
    %c0_i32_1 = arith.constant 0 : i32
    return %c0_i32, %c0_i32_0 : i32, i32
  }
  func.func @transform_4(%arg0: i32) -> (i32, i32) {
    %c0_i32 = arith.constant 0 : i32
    %c0_i32_0 = arith.constant 0 : i32
    %c0_i32_1 = arith.constant 0 : i32
    return %c0_i32, %c0_i32_0 : i32, i32
  }
  func.func @transform_5(%arg0: i32) -> (i32, i32) {
    %c0_i32 = arith.constant 0 : i32
    %c0_i32_0 = arith.constant 0 : i32
    %c0_i32_1 = arith.constant 0 : i32
    return %c0_i32, %c0_i32_0 : i32, i32
  }
  func.func @transform_6(%arg0: i32) -> (i32, i32) {
    %c0_i32 = arith.constant 0 : i32
    %c0_i32_0 = arith.constant 0 : i32
    %c0_i32_1 = arith.constant 0 : i32
    return %c0_i32, %c0_i32_0 : i32, i32
  }
  func.func @transform_7(%arg0: i32) -> (i32, i32, i32) {
    %c0_i32 = arith.constant 0 : i32
    %c0_i32_0 = arith.constant 0 : i32
    %c0_i32_1 = arith.constant 0 : i32
    return %arg0, %c0_i32, %c0_i32_0 : i32, i32, i32
  }
}

</mosaic_0001>

<llo_original>
// kernel: tpu_custom_call.1
$region0: #{tpu_custom_call.1}
  #allocation0 [shape = 'u32[]', space=smem, size = 0x4, offset = 0x4, fixed_abs, tag = 'smem constant byte address 0x4 - core index']
  #allocation1 [shape = 'u32[72,128]{1,0:T(1,128)}', space=vmem, size = 0x9000, scoped, tag = 'internal scratch']
  %s0 = inlined_call_operand.hbm [shape: bf16[2,16,64], index: 0, kind: input, shape index: {}]
  %s1 = inlined_call_operand.hbm [shape: bf16[192,128], index: 1, kind: input, shape index: {}]
  %s2 = inlined_call_operand.hbm [shape: bf16[384,128], index: 2, kind: input, shape index: {}]
  %s3 = inlined_call_operand.vmem [shape: f32[1,64], index: 3, kind: input, shape index: {}]
  %s4 = inlined_call_operand.vmem [shape: f32[1,64], index: 4, kind: input, shape index: {}]
  %s5 = inlined_call_operand.vmem [shape: f32[1,128], index: 5, kind: input, shape index: {}]
  %s6 = inlined_call_operand.vmem [shape: f32[1,128], index: 6, kind: input, shape index: {}]
  %s7 = inlined_call_operand.hbm [shape: bf16[2,16,128], index: 7, kind: output, shape index: {}]
  %s8 = sld [smem:[#allocation0]]
  $region73: #{tpu_custom_call.1} parent=0
    _
  %s10 = ssub.s32 1, %s8
  %s11 = scalar_select 0, %s10, %s8
  $region1: #{tpu_custom_call.1} parent=0
    #allocation2 [shape = 'u8[8192]{0}', space=vmem, size = 0x2000, scoped, tag = 'input window, operand 0']
    #allocation3 [shape = 's32[2]{0}', space=sflag, size = 0x8, scoped, tag = 'scoped memory for tpu_custom_call.1']
    #allocation4 [shape = 's32[2]{0}', space=sflag, size = 0x8, scoped, tag = 'scoped memory for tpu_custom_call.1']
    #allocation5 [shape = 'u8[49152]{0}', space=vmem, size = 0xc000, scoped, tag = 'input window, operand 1, single buffered']
    #allocation6 [shape = 's32[1]{0}', space=sflag, size = 0x4, scoped, tag = 'scoped memory for tpu_custom_call.1']
    #allocation7 [shape = 'u8[98304]{0}', space=vmem, size = 0x18000, scoped, tag = 'input window, operand 2, single buffered']
    #allocation8 [shape = 'u8[8192]{0}', space=vmem, size = 0x2000, scoped, tag = 'output window, operand 0']
    %12 = vsyncpa [#allocation3], 0
    %s13 = scalar_lea.sflag [#allocation3], 1
    %14 = vsyncpa %s13, 0
    %15 = vsyncpa [#allocation6], 0
    %16 = vsyncpa [#allocation4], 0
    %s17 = scalar_lea.sflag [#allocation4], 1
    %18 = vsyncpa %s17, 0
    loop: start=0, step=1, limit=4
    $region2: #{tpu_custom_call.1} parent=1 // loop_pre_header
      _
    $region3: #{tpu_custom_call.1} parent=1 // loop_header
      %s20 = sphi 0, %s24
      %p21 = scmp.ge.s32.totalorder %s20, 4
      %s30 = sphi 0, %s32
      %s33 = sphi 0, %s30
      %s34 = sphi 0, %s33
      %s50 = sphi 0, %s34
      %s54 = sphi 0, %s54
      %s56 = sphi 0, %s54
      %s57 = sphi 0, %s56
      %s71 = sphi 0, %s57
      %s75 = sphi 0, %s75
      %s77 = sphi 0, %s75
      %s78 = sphi 0, %s77
      %s92 = sphi 0, %s78
      %s96 = sphi 0, %s96
      %s98 = sphi 0, %s96
      %s99 = sphi 0, %s98
      %s113 = sphi 0, %s99
      %s117 = sphi 0, %s117
      %s119 = sphi 0, %s117
      %s120 = sphi 0, %s119
      %s134 = sphi 0, %s120
      %s138 = sphi 0, %s138
      %s140 = sphi 0, %s138
      %s141 = sphi 0, %s140
      %s155 = sphi 0, %s141
      %s159 = sphi 0, %s159
      %s161 = sphi 0, %s159
      %s162 = sphi 0, %s161
      %s176 = sphi 0, %s162
      %s182 = sphi 0, %s184
      %s185 = sphi 0, %s182
      %s186 = sphi 0, %s185
      %s202 = sphi 0, %s186
    $region4: #{tpu_custom_call.1} parent=1 // loop_header_branch
      %23 = sbr.rel (%p21) target = $region8
    $region5: #{tpu_custom_call.1} parent=1 // loop_body
      %s25 = ssub.s32 %s20, 1
      %s26 = ssub.s32 %s20, 2
      %s27 = sadd.s32 %s20, 1
      %s28 = ssub.s32 %s20, %s27
      %p29 = scmp.eq.s32.totalorder %s28, 0
      %s31 = sadd.s32 %s30, 1
      %s32 = scalar_select %p29, %s30, %s31
      %p35 = pneg %p29
      %p36 = scmp.eq.s32.totalorder %s20, 1
      %p37 = por %p35, %p36
      %p38 = scmp.ne.s32.totalorder %s30, %s33
      %p39 = scmp.eq.s32.totalorder %s20, 0
      %p40 = por %p38, %p39
      %p41 = scmp.ne.s32.totalorder %s30, %s33
      %p42 = scmp.eq.s32.totalorder %s25, 1
      %p43 = por %p41, %p42
      %p44 = scmp.ne.s32.totalorder %s33, %s34
      %p45 = scmp.eq.s32.totalorder %s25, 0
      %p46 = por %p44, %p45
      %p47 = scmp.ne.s32.totalorder %s33, %s34
      %p48 = scmp.eq.s32.totalorder %s26, 1
      %p49 = por %p47, %p48
      %p51 = scmp.ne.s32.totalorder %s34, %s50
      %p52 = scmp.eq.s32.totalorder %s26, 0
      %p53 = por %p51, %p52
      %s55 = sadd.s32 %s54, 1
      %p58 = scmp.eq.s32.totalorder %s20, 1
      %p59 = scmp.ne.s32.totalorder %s54, %s56
      %p60 = scmp.eq.s32.totalorder %s20, 0
      %p61 = por %p59, %p60
      %p62 = scmp.ne.s32.totalorder %s54, %s56
      %p63 = scmp.eq.s32.totalorder %s25, 1
      %p64 = por %p62, %p63
      %p65 = scmp.ne.s32.totalorder %s56, %s57
      %p66 = scmp.eq.s32.totalorder %s25, 0
      %p67 = por %p65, %p66
      %p68 = scmp.ne.s32.totalorder %s56, %s57
      %p69 = scmp.eq.s32.totalorder %s26, 1
      %p70 = por %p68, %p69
      %p72 = scmp.ne.s32.totalorder %s57, %s71
      %p73 = scmp.eq.s32.totalorder %s26, 0
      %p74 = por %p72, %p73
      %s76 = sadd.s32 %s75, 1
      %p79 = scmp.eq.s32.totalorder %s20, 1
      %p80 = scmp.ne.s32.totalorder %s75, %s77
      %p81 = scmp.eq.s32.totalorder %s20, 0
      %p82 = por %p80, %p81
      %p83 = scmp.ne.s32.totalorder %s75, %s77
      %p84 = scmp.eq.s32.totalorder %s25, 1
      %p85 = por %p83, %p84
      %p86 = scmp.ne.s32.totalorder %s77, %s78
      %p87 = scmp.eq.s32.totalorder %s25, 0
      %p88 = por %p86, %p87
      %p89 = scmp.ne.s32.totalorder %s77, %s78
      %p90 = scmp.eq.s32.totalorder %s26, 1
      %p91 = por %p89, %p90
      %p93 = scmp.ne.s32.totalorder %s78, %s92
      %p94 = scmp.eq.s32.totalorder %s26, 0
      %p95 = por %p93, %p94
      %s97 = sadd.s32 %s96, 1
      %p100 = scmp.eq.s32.totalorder %s20, 1
      %p101 = scmp.ne.s32.totalorder %s96, %s98
      %p102 = scmp.eq.s32.totalorder %s20, 0
      %p103 = por %p101, %p102
      %p104 = scmp.ne.s32.totalorder %s96, %s98
      %p105 = scmp.eq.s32.totalorder %s25, 1
      %p106 = por %p104, %p105
      %p107 = scmp.ne.s32.totalorder %s98, %s99
      %p108 = scmp.eq.s32.totalorder %s25, 0
      %p109 = por %p107, %p108
      %p110 = scmp.ne.s32.totalorder %s98, %s99
      %p111 = scmp.eq.s32.totalorder %s26, 1
      %p112 = por %p110, %p111
      %p114 = scmp.ne.s32.totalorder %s99, %s113
      %p115 = scmp.eq.s32.totalorder %s26, 0
      %p116 = por %p114, %p115
      %s118 = sadd.s32 %s117, 1
      %p121 = scmp.eq.s32.totalorder %s20, 1
      %p122 = scmp.ne.s32.totalorder %s117, %s119
      %p123 = scmp.eq.s32.totalorder %s20, 0
      %p124 = por %p122, %p123
      %p125 = scmp.ne.s32.totalorder %s117, %s119
      %p126 = scmp.eq.s32.totalorder %s25, 1
      %p127 = por %p125, %p126
      %p128 = scmp.ne.s32.totalorder %s119, %s120
      %p129 = scmp.eq.s32.totalorder %s25, 0
      %p130 = por %p128, %p129
      %p131 = scmp.ne.s32.totalorder %s119, %s120
      %p132 = scmp.eq.s32.totalorder %s26, 1
      %p133 = por %p131, %p132
      %p135 = scmp.ne.s32.totalorder %s120, %s134
      %p136 = scmp.eq.s32.totalorder %s26, 0
      %p137 = por %p135, %p136
      %s139 = sadd.s32 %s138, 1
      %p142 = scmp.eq.s32.totalorder %s20, 1
      %p143 = scmp.ne.s32.totalorder %s138, %s140
      %p144 = scmp.eq.s32.totalorder %s20, 0
      %p145 = por %p143, %p144
      %p146 = scmp.ne.s32.totalorder %s138, %s140
      %p147 = scmp.eq.s32.totalorder %s25, 1
      %p148 = por %p146, %p147
      %p149 = scmp.ne.s32.totalorder %s140, %s141
      %p150 = scmp.eq.s32.totalorder %s25, 0
      %p151 = por %p149, %p150
      %p152 = scmp.ne.s32.totalorder %s140, %s141
      %p153 = scmp.eq.s32.totalorder %s26, 1
      %p154 = por %p152, %p153
      %p156 = scmp.ne.s32.totalorder %s141, %s155
      %p157 = scmp.eq.s32.totalorder %s26, 0
      %p158 = por %p156, %p157
      %s160 = sadd.s32 %s159, 1
      %p163 = scmp.eq.s32.totalorder %s20, 1
      %p164 = scmp.ne.s32.totalorder %s159, %s161
      %p165 = scmp.eq.s32.totalorder %s20, 0
      %p166 = por %p164, %p165
      %p167 = scmp.ne.s32.totalorder %s159, %s161
      %p168 = scmp.eq.s32.totalorder %s25, 1
      %p169 = por %p167, %p168
      %p170 = scmp.ne.s32.totalorder %s161, %s162
      %p171 = scmp.eq.s32.totalorder %s25, 0
      %p172 = por %p170, %p171
      %p173 = scmp.ne.s32.totalorder %s161, %s162
      %p174 = scmp.eq.s32.totalorder %s26, 1
      %p175 = por %p173, %p174
      %p177 = scmp.ne.s32.totalorder %s162, %s176
      %p178 = scmp.eq.s32.totalorder %s26, 0
      %p179 = por %p177, %p178
      %s180 = ssub.s32 %s20, %s27
      %p181 = scmp.eq.s32.totalorder %s180, 0
      %s183 = sadd.s32 %s182, 1
      %s184 = scalar_select %p181, %s182, %s183
      %p187 = pneg %p181
      %p188 = scmp.eq.s32.totalorder %s20, 1
      %p189 = por %p187, %p188
      %p190 = scmp.ne.s32.totalorder %s182, %s185
      %p191 = scmp.eq.s32.totalorder %s20, 0
      %p192 = por %p190, %p191
      %p193 = scmp.ne.s32.totalorder %s182, %s185
      %p194 = scmp.eq.s32.totalorder %s25, 1
      %p195 = por %p193, %p194
      %p196 = scmp.ne.s32.totalorder %s185, %s186
      %p197 = scmp.eq.s32.totalorder %s25, 0
      %p198 = por %p196, %p197
      %p199 = scmp.ne.s32.totalorder %s185, %s186
      %p200 = scmp.eq.s32.totalorder %s26, 1
      %p201 = por %p199, %p200
      %p203 = scmp.ne.s32.totalorder %s186, %s202
      %p204 = scmp.eq.s32.totalorder %s26, 0
      %p205 = por %p203, %p204
      %p206 = scmp.le.s32.totalorder 1, %s20
      %p207 = scmp.lt.s32.totalorder %s20, 3
      %p208 = pnand %p206, %p207
      %p209 = pneg %p208
      // Predicated region
      $region9: #{tpu_custom_call.1} parent=5 // pred_check
        _
      $region10: #{tpu_custom_call.1} parent=5 // pred_check_branch
        %211 = sbr.rel (%p208) target = $region12
      $region11: #{tpu_custom_call.1} parent=5 // pred_region
        %s212 = ssub.s32 %s20, 1
        // Predicated region
        $region13: #{tpu_custom_call.1} parent=11 // pred_check
          %p213 = pneg %p67
        $region14: #{tpu_custom_call.1} parent=11 // pred_check_branch
          %215 = sbr.rel (%p213) target = $region16
        $region15: #{tpu_custom_call.1} parent=11 // pred_region
          %217 = vsyncadd [#allocation6], 0
          %s218 = sshll.u32 %s1, 4
          %s219 = int_to_ptr.hbm [resolvable:$true] %s218
          %s220 = sshll.u32 [#allocation5], 4
          %s221 = int_to_ptr.vmem [resolvable:$true] %s220
          %226 = dma.hbm_to_vmem [thread:$0]  %s219, 1536, %s221, [#allocation6], 64, 64, 4
        $region16: #{tpu_custom_call.1} parent=11 // pred_fallthru
          _
        // Predicated region
        $region17: #{tpu_custom_call.1} parent=11 // pred_check
          %p227 = pneg %p88
        $region18: #{tpu_custom_call.1} parent=11 // pred_check_branch
          %229 = sbr.rel (%p227) target = $region20
        $region19: #{tpu_custom_call.1} parent=11 // pred_region
          %231 = vsyncadd [#allocation6], 0
          %s232 = sshll.u32 %s2, 4
          %s233 = int_to_ptr.hbm [resolvable:$true] %s232
          %s234 = sshll.u32 [#allocation7], 4
          %s235 = int_to_ptr.vmem [resolvable:$true] %s234
          %240 = dma.hbm_to_vmem [thread:$0]  %s233, 3072, %s235, [#allocation6], 64, 64, 4
        $region20: #{tpu_custom_call.1} parent=11 // pred_fallthru
          _
        // Predicated region
        $region21: #{tpu_custom_call.1} parent=11 // pred_check
          %p241 = pneg %p109
        $region22: #{tpu_custom_call.1} parent=11 // pred_check_branch
          %243 = sbr.rel (%p241) target = $region24
        $region23: #{tpu_custom_call.1} parent=11 // pred_region
          _
        $region24: #{tpu_custom_call.1} parent=11 // pred_fallthru
          _
        // Predicated region
        $region25: #{tpu_custom_call.1} parent=11 // pred_check
          %p244 = pneg %p130
        $region26: #{tpu_custom_call.1} parent=11 // pred_check_branch
          %246 = sbr.rel (%p244) target = $region28
        $region27: #{tpu_custom_call.1} parent=11 // pred_region
          _
        $region28: #{tpu_custom_call.1} parent=11 // pred_fallthru
          _
        // Predicated region
        $region29: #{tpu_custom_call.1} parent=11 // pred_check
          %p247 = pneg %p151
        $region30: #{tpu_custom_call.1} parent=11 // pred_check_branch
          %249 = sbr.rel (%p247) target = $region32
        $region31: #{tpu_custom_call.1} parent=11 // pred_region
          _
        $region32: #{tpu_custom_call.1} parent=11 // pred_fallthru
          _
        // Predicated region
        $region33: #{tpu_custom_call.1} parent=11 // pred_check
          %p250 = pneg %p172
        $region34: #{tpu_custom_call.1} parent=11 // pred_check_branch
          %252 = sbr.rel (%p250) target = $region36
        $region35: #{tpu_custom_call.1} parent=11 // pred_region
          _
        $region36: #{tpu_custom_call.1} parent=11 // pred_fallthru
          _
      $region12: #{tpu_custom_call.1} parent=5 // pred_fallthru
        _
      %p253 = scmp.lt.s32.totalorder %s20, 2
      // Predicated region
      $region37: #{tpu_custom_call.1} parent=5 // pred_check
        %p254 = pneg %p253
      $region38: #{tpu_custom_call.1} parent=5 // pred_check_branch
        %256 = sbr.rel (%p254) target = $region40
      $region39: #{tpu_custom_call.1} parent=5 // pred_region
        // Predicated region
        $region41: #{tpu_custom_call.1} parent=39 // pred_check
          %p257 = pneg %p40
        $region42: #{tpu_custom_call.1} parent=39 // pred_check_branch
          %259 = sbr.rel (%p257) target = $region44
        $region43: #{tpu_custom_call.1} parent=39 // pred_region
          %s260 = sand.u32 %s30, 1
          %s261 = scalar_lea.sflag [#allocation3], %s260
          %s262 = sand.u32 %s30, 1
          %s263 = smul.addr %s262, 8
          %s264 = scalar_lea.vmem [#allocation2], %s263
          %266 = vsyncadd %s261, 0
          %s267 = smul.addr %s20, 2
          %s268 = smul.addr %s267, 4
          %s269 = scalar_lea.hbm %s0, %s268
          %s270 = sshll.u32 %s269, 4
          %s271 = int_to_ptr.hbm [resolvable:$true] %s270
          %s272 = sshll.u32 %s264, 4
          %s273 = int_to_ptr.vmem [resolvable:$true] %s272
          %278 = dma.hbm_to_vmem [thread:$0]  %s271, 128, %s273, %s261, 64, 64, 4
        $region44: #{tpu_custom_call.1} parent=39 // pred_fallthru
          _
      $region40: #{tpu_custom_call.1} parent=5 // pred_fallthru
        _
      %p279 = scmp.le.s32.totalorder 1, %s20
      %p280 = scmp.lt.s32.totalorder %s20, 3
      %p281 = pnand %p279, %p280
      %p282 = pneg %p281
      // Predicated region
      $region45: #{tpu_custom_call.1} parent=5 // pred_check
        _
      $region46: #{tpu_custom_call.1} parent=5 // pred_check_branch
        %284 = sbr.rel (%p281) target = $region48
      $region47: #{tpu_custom_call.1} parent=5 // pred_region
        %s285 = ssub.s32 %s20, 1
        %s286 = sand.u32 %s33, 1
        %s287 = scalar_lea.sflag [#allocation3], %s286
        %s288 = sand.u32 %s33, 1
        %s289 = smul.addr %s288, 8
        %s290 = scalar_lea.vmem [#allocation2], %s289
        // Predicated region
        $region49: #{tpu_custom_call.1} parent=47 // pred_check
          %p291 = pneg %p46
        $region50: #{tpu_custom_call.1} parent=47 // pred_check_branch
          %293 = sbr.rel (%p291) target = $region52
        $region51: #{tpu_custom_call.1} parent=47 // pred_region
          %295 = dma.done %s287, 128
        $region52: #{tpu_custom_call.1} parent=47 // pred_fallthru
          _
        // Predicated region
        $region53: #{tpu_custom_call.1} parent=47 // pred_check
          %p296 = pneg %p67
        $region54: #{tpu_custom_call.1} parent=47 // pred_check_branch
          %298 = sbr.rel (%p296) target = $region56
        $region55: #{tpu_custom_call.1} parent=47 // pred_region
          %300 = dma.done [#allocation6], 1536
        $region56: #{tpu_custom_call.1} parent=47 // pred_fallthru
          _
        // Predicated region
        $region57: #{tpu_custom_call.1} parent=47 // pred_check
          %p301 = pneg %p88
        $region58: #{tpu_custom_call.1} parent=47 // pred_check_branch
          %303 = sbr.rel (%p301) target = $region60
        $region59: #{tpu_custom_call.1} parent=47 // pred_region
          %305 = dma.done [#allocation6], 3072
        $region60: #{tpu_custom_call.1} parent=47 // pred_fallthru
          _
        %s306 = sand.u32 %s33, 1
        %s307 = scalar_lea.sflag [#allocation3], %s306
        %s308 = sand.u32 %s33, 1
        %s309 = smul.addr %s308, 8
        %s310 = scalar_lea.vmem [#allocation2], %s309
        %p311 = pneg %p46
        %p312 = pneg %p43
        %p313 = pneg %p67
        %p314 = pneg %p64
        %p315 = pneg %p88
        %p316 = pneg %p85
        %p317 = pneg %p109
        %p318 = pneg %p106
        %p319 = pneg %p130
        %p320 = pneg %p127
        %p321 = pneg %p151
        %p322 = pneg %p148
        %p323 = pneg %p172
        %p324 = pneg %p169
        %p325 = pneg %p198
        %p326 = pneg %p195
        %s327 = sand.u32 %s185, 1
        %s328 = scalar_lea.sflag [#allocation4], %s327
        %s329 = sand.u32 %s185, 1
        %s330 = smul.addr %s329, 8
        %s331 = scalar_lea.vmem [#allocation8], %s330
        %v333 = vld [vmem:[%s290] sm:$0xf]
        %v334 = vld [vmem:[%s290 + $0x4] sm:$0xf]
        %v335 = vunpack.c.l.bf16 %v333
        %v336 = vunpack.c.l.bf16 %v334
        %v337 = vld [vmem:[%s3] sm:$0x1]
        %v339 = vperm.slane %v337, 0
        %v341 = vmul.f32 %v335, %v339
        %v342 = vmul.f32 %v336, %v339
        %v343 = vld [vmem:[%s4] sm:$0x1]
        %v345 = vperm.slane %v343, 0
        %v347 = vadd.f32 %v341, %v345
        %v348 = vadd.f32 %v342, %v345
        %v349 = vmax.f32 %v347, 0.0
        %v350 = vmax.f32 %v348, 0.0
        %vm353 = vcmask 1040384
        %v354 = vrot.slane %v349, 7
        %v355 = vrot.slane %v350, 7
        %v356 = vsel %vm353, %v354, %v355
        %v360 = vsel %vm353, 0.0, %v354
        %v361 = vsel %vm353, %v355, 0.0
        %v362 = vpack.c.bf16 %v356, %v360
        %v363 = vld [vmem:[#allocation5] sm:$0xf]
        %v364 = vld [vmem:[#allocation5 + $0x4] sm:$0xf]
        %v365 = vld [vmem:[#allocation5 + $0x8] sm:$0xf]
        %v366 = vld [vmem:[#allocation5 + $0xc] sm:$0xf]
        %v367 = vld [vmem:[#allocation5 + $0x10] sm:$0xf]
        %v368 = vld [vmem:[#allocation5 + $0x14] sm:$0xf]
        %v369 = vld [vmem:[#allocation5 + $0x18] sm:$0xf]
        %v370 = vld [vmem:[#allocation5 + $0x1c] sm:$0xf]
        %v371 = vpack.c.bf16 %v361, %v361
        %v372 = vld [vmem:[#allocation5 + $0x20] sm:$0xf]
        %v373 = vld [vmem:[#allocation5 + $0x24] sm:$0xf]
        %v374 = vld [vmem:[#allocation5 + $0x28] sm:$0xf]
        %v375 = vld [vmem:[#allocation5 + $0x2c] sm:$0xf]
        %v376 = vld [vmem:[#allocation5 + $0x30] sm:$0xf]
        %v377 = vld [vmem:[#allocation5 + $0x34] sm:$0xf]
        %v378 = vld [vmem:[#allocation5 + $0x38] sm:$0xf]
        %v379 = vld [vmem:[#allocation5 + $0x3c] sm:$0xf]
        %vm380 = vsmask.f32 7424
        %v382 = vshrl.u32 %v362, 16
        %v384 = vshll.u32 %v362, 16
        %v386 = vrot.slane %v384, 1
        %v387 = vor.u32 %v382, %v386
        %v389 = vshll.u32 %v371, 16
        %v391 = vrot.slane %v389, 1
        %v392 = vsel %vm380, %v387, %v391
        %v401 = vunpack.c.l.b16 %v372
        %v402 = vunpack.c.l.b16 %v373
        %v403 = vunpack.c.l.b16 %v374
        %v404 = vunpack.c.l.b16 %v375
        %v405 = vunpack.c.l.b16 %v376
        %v406 = vunpack.c.l.b16 %v377
        %v407 = vunpack.c.l.b16 %v378
        %v408 = vunpack.c.l.b16 %v379
        %v409 = vpack.c.b16 %v402, %v401
        %v410 = vpack.c.b16 %v404, %v403
        %v411 = vpack.c.b16 %v406, %v405
        %v412 = vpack.c.b16 %v408, %v407
        %vm417 = vcmask 523264
        %v419 = vsel %vm417, %v392, 0
        %421 = vmatpush.bf16.msra.mxu0 0
        %422 = vmatpush.bf16.msra.mxu0 0
        %423 = vmatpush.bf16.msra.mxu0 0
        %424 = vmatpush.bf16.msra.mxu0 0
        %425 = vmatpush.bf16.msra.mxu0 %v412
        %426 = vmatpush.bf16.msra.mxu0 %v411
        %427 = vmatpush.bf16.msra.mxu0 %v410
        %428 = vmatpush.bf16.msra.mxu0 %v409
        %429 = vmatmul.bf16.gmra.mxu0 %v419
        %v430 = vpop.f32.mrf.mxu0
        %v431 = vadd.f32 0.0, %v430
        %v432 = vpop.f32.mrf.mxu0
        %v433 = vadd.f32 0.0, %v432
        %434 = vdwg.mxu0
        %v443 = vunpack.c.l.b16 %v363
        %v444 = vunpack.c.l.b16 %v364
        %v445 = vunpack.c.l.b16 %v365
        %v446 = vunpack.c.l.b16 %v366
        %v447 = vunpack.c.l.b16 %v367
        %v448 = vunpack.c.l.b16 %v368
        %v449 = vunpack.c.l.b16 %v369
        %v450 = vunpack.c.l.b16 %v370
        %v451 = vpack.c.b16 %v444, %v443
        %v452 = vpack.c.b16 %v446, %v445
        %v453 = vpack.c.b16 %v448, %v447
        %v454 = vpack.c.b16 %v450, %v449
        %v459 = vsel %vm417, %v362, 0
        %461 = vmatpush.bf16.msra.mxu0 0
        %462 = vmatpush.bf16.msra.mxu0 0
        %463 = vmatpush.bf16.msra.mxu0 0
        %464 = vmatpush.bf16.msra.mxu0 0
        %465 = vmatpush.bf16.msra.mxu0 %v454
        %466 = vmatpush.bf16.msra.mxu0 %v453
        %467 = vmatpush.bf16.msra.mxu0 %v452
        %468 = vmatpush.bf16.msra.mxu0 %v451
        %469 = vmatmul.bf16.gmra.mxu0 %v459
        %v470 = vpop.f32.mrf.mxu0
        %v471 = vadd.f32 %v431, %v470
        %v472 = vpop.f32.mrf.mxu0
        %v473 = vadd.f32 %v433, %v472
        %474 = vdwg.mxu0
        %v475 = vld [vmem:[#allocation5 + $0x40] sm:$0xf]
        %v476 = vld [vmem:[#allocation5 + $0x44] sm:$0xf]
        %v477 = vld [vmem:[#allocation5 + $0x48] sm:$0xf]
        %v478 = vld [vmem:[#allocation5 + $0x4c] sm:$0xf]
        %v479 = vld [vmem:[#allocation5 + $0x50] sm:$0xf]
        %v480 = vld [vmem:[#allocation5 + $0x54] sm:$0xf]
        %v481 = vld [vmem:[#allocation5 + $0x58] sm:$0xf]
        %v482 = vld [vmem:[#allocation5 + $0x5c] sm:$0xf]
        %vm485 = vcmask 1046528
        %v486 = vrot.slane %v362, 1
        %v487 = vrot.slane %v371, 1
        %v488 = vsel %vm485, %v486, %v487
        %v497 = vunpack.c.l.b16 %v475
        %v498 = vunpack.c.l.b16 %v476
        %v499 = vunpack.c.l.b16 %v477
        %v500 = vunpack.c.l.b16 %v478
        %v501 = vunpack.c.l.b16 %v479
        %v502 = vunpack.c.l.b16 %v480
        %v503 = vunpack.c.l.b16 %v481
        %v504 = vunpack.c.l.b16 %v482
        %v505 = vpack.c.b16 %v498, %v497
        %v506 = vpack.c.b16 %v500, %v499
        %v507 = vpack.c.b16 %v502, %v501
        %v508 = vpack.c.b16 %v504, %v503
        %v514 = vsel %vm417, %v488, 0
        %516 = vmatpush.bf16.msra.mxu0 0
        %517 = vmatpush.bf16.msra.mxu0 0
        %518 = vmatpush.bf16.msra.mxu0 0
        %519 = vmatpush.bf16.msra.mxu0 0
        %520 = vmatpush.bf16.msra.mxu0 %v508
        %521 = vmatpush.bf16.msra.mxu0 %v507
        %522 = vmatpush.bf16.msra.mxu0 %v506
        %523 = vmatpush.bf16.msra.mxu0 %v505
        %524 = vmatmul.bf16.gmra.mxu0 %v514
        %v525 = vpop.f32.mrf.mxu0
        %v526 = vadd.f32 0.0, %v525
        %v527 = vpop.f32.mrf.mxu0
        %v528 = vadd.f32 0.0, %v527
        %529 = vdwg.mxu0
        %v530 = vadd.f32 %v471, %v526
        %v531 = vadd.f32 %v473, %v528
        %v532 = vld [vmem:[%s5] sm:$0x1]
        %v534 = vperm.slane %v532, 0
        %v536 = vmul.f32 %v530, %v534
        %v537 = vmul.f32 %v531, %v534
        %v538 = vld [vmem:[%s6] sm:$0x1]
        %v540 = vperm.slane %v538, 0
        %v542 = vadd.f32 %v536, %v540
        %v543 = vadd.f32 %v537, %v540
        %v544 = vmax.f32 %v542, 0.0
        %v545 = vmax.f32 %v543, 0.0
        %v548 = vrot.slane %v544, 7
        %v549 = vrot.slane %v545, 7
        %v550 = vsel %vm353, %v548, %v549
        %v554 = vsel %vm353, 0.0, %v548
        %v555 = vsel %vm353, %v549, 0.0
        %vm558 = vcmask 1046528
        %v559 = vrot.slane %v554, 1
        %v560 = vrot.slane %v550, 1
        %v561 = vsel %vm558, %v559, %v560
        %v562 = vrot.slane %v555, 1
        %v563 = vsel %vm558, %v560, %v562
        %vm566 = vcmask 1045504
        %v567 = vrot.slane %v554, 2
        %v568 = vrot.slane %v550, 2
        %v569 = vsel %vm566, %v567, %v568
        %v570 = vrot.slane %v555, 2
        %v571 = vsel %vm566, %v568, %v570
        %v574 = vpack.c.bf16 %v550, %v554
        %v575 = vpack.c.bf16 %v563, %v561
        %v576 = vpack.c.bf16 %v571, %v569
        %v577 = vld [vmem:[#allocation7] sm:$0xf]
        %v578 = vld [vmem:[#allocation7 + $0x4] sm:$0xf]
        %v579 = vld [vmem:[#allocation7 + $0x8] sm:$0xf]
        %v580 = vld [vmem:[#allocation7 + $0xc] sm:$0xf]
        %v581 = vld [vmem:[#allocation7 + $0x10] sm:$0xf]
        %v582 = vld [vmem:[#allocation7 + $0x14] sm:$0xf]
        %v583 = vld [vmem:[#allocation7 + $0x18] sm:$0xf]
        %v584 = vld [vmem:[#allocation7 + $0x1c] sm:$0xf]
        %v585 = vld [vmem:[#allocation7 + $0x20] sm:$0xf]
        %v586 = vld [vmem:[#allocation7 + $0x24] sm:$0xf]
        %v587 = vld [vmem:[#allocation7 + $0x28] sm:$0xf]
        %v588 = vld [vmem:[#allocation7 + $0x2c] sm:$0xf]
        %v589 = vld [vmem:[#allocation7 + $0x30] sm:$0xf]
        %v590 = vld [vmem:[#allocation7 + $0x34] sm:$0xf]
        %v591 = vld [vmem:[#allocation7 + $0x38] sm:$0xf]
        %v592 = vld [vmem:[#allocation7 + $0x3c] sm:$0xf]
        %v593 = vld [vmem:[#allocation7 + $0x40] sm:$0xf]
        %v594 = vld [vmem:[#allocation7 + $0x44] sm:$0xf]
        %v595 = vld [vmem:[#allocation7 + $0x48] sm:$0xf]
        %v596 = vld [vmem:[#allocation7 + $0x4c] sm:$0xf]
        %v597 = vld [vmem:[#allocation7 + $0x50] sm:$0xf]
        %v598 = vld [vmem:[#allocation7 + $0x54] sm:$0xf]
        %v599 = vld [vmem:[#allocation7 + $0x58] sm:$0xf]
        %v600 = vld [vmem:[#allocation7 + $0x5c] sm:$0xf]
        %v601 = vld [vmem:[#allocation7 + $0x60] sm:$0xf]
        %v602 = vld [vmem:[#allocation7 + $0x64] sm:$0xf]
        %v603 = vld [vmem:[#allocation7 + $0x68] sm:$0xf]
        %v604 = vld [vmem:[#allocation7 + $0x6c] sm:$0xf]
        %v605 = vld [vmem:[#allocation7 + $0x70] sm:$0xf]
        %v606 = vld [vmem:[#allocation7 + $0x74] sm:$0xf]
        %v607 = vld [vmem:[#allocation7 + $0x78] sm:$0xf]
        %v608 = vld [vmem:[#allocation7 + $0x7c] sm:$0xf]
        %v609 = vld [vmem:[#allocation7 + $0x80] sm:$0xf]
        %v610 = vld [vmem:[#allocation7 + $0x84] sm:$0xf]
        %v611 = vld [vmem:[#allocation7 + $0x88] sm:$0xf]
        %v612 = vld [vmem:[#allocation7 + $0x8c] sm:$0xf]
        %v613 = vld [vmem:[#allocation7 + $0x90] sm:$0xf]
        %v614 = vld [vmem:[#allocation7 + $0x94] sm:$0xf]
        %v615 = vld [vmem:[#allocation7 + $0x98] sm:$0xf]
        %v616 = vld [vmem:[#allocation7 + $0x9c] sm:$0xf]
        %v617 = vld [vmem:[#allocation7 + $0xa0] sm:$0xf]
        %v618 = vld [vmem:[#allocation7 + $0xa4] sm:$0xf]
        %v619 = vld [vmem:[#allocation7 + $0xa8] sm:$0xf]
        %v620 = vld [vmem:[#allocation7 + $0xac] sm:$0xf]
        %v621 = vld [vmem:[#allocation7 + $0xb0] sm:$0xf]
        %v622 = vld [vmem:[#allocation7 + $0xb4] sm:$0xf]
        %v623 = vld [vmem:[#allocation7 + $0xb8] sm:$0xf]
        %v624 = vld [vmem:[#allocation7 + $0xbc] sm:$0xf]
        %v673 = vunpack.c.l.b16 %v577
        %v674 = vunpack.c.l.b16 %v578
        %v675 = vunpack.c.l.b16 %v579
        %v676 = vunpack.c.l.b16 %v580
        %v677 = vunpack.c.l.b16 %v581
        %v678 = vunpack.c.l.b16 %v582
        %v679 = vunpack.c.l.b16 %v583
        %v680 = vunpack.c.l.b16 %v584
        %v681 = vunpack.c.l.b16 %v585
        %v682 = vunpack.c.l.b16 %v586
        %v683 = vunpack.c.l.b16 %v587
        %v684 = vunpack.c.l.b16 %v588
        %v685 = vunpack.c.l.b16 %v589
        %v686 = vunpack.c.l.b16 %v590
        %v687 = vunpack.c.l.b16 %v591
        %v688 = vunpack.c.l.b16 %v592
        %v689 = vunpack.c.l.b16 %v593
        %v690 = vunpack.c.l.b16 %v594
        %v691 = vunpack.c.l.b16 %v595
        %v692 = vunpack.c.l.b16 %v596
        %v693 = vunpack.c.l.b16 %v597
        %v694 = vunpack.c.l.b16 %v598
        %v695 = vunpack.c.l.b16 %v599
        %v696 = vunpack.c.l.b16 %v600
        %v697 = vunpack.c.l.b16 %v601
        %v698 = vunpack.c.l.b16 %v602
        %v699 = vunpack.c.l.b16 %v603
        %v700 = vunpack.c.l.b16 %v604
        %v701 = vunpack.c.l.b16 %v605
        %v702 = vunpack.c.l.b16 %v606
        %v703 = vunpack.c.l.b16 %v607
        %v704 = vunpack.c.l.b16 %v608
        %v705 = vunpack.c.l.b16 %v609
        %v706 = vunpack.c.l.b16 %v610
        %v707 = vunpack.c.l.b16 %v611
        %v708 = vunpack.c.l.b16 %v612
        %v709 = vunpack.c.l.b16 %v613
        %v710 = vunpack.c.l.b16 %v614
        %v711 = vunpack.c.l.b16 %v615
        %v712 = vunpack.c.l.b16 %v616
        %v713 = vunpack.c.l.b16 %v617
        %v714 = vunpack.c.l.b16 %v618
        %v715 = vunpack.c.l.b16 %v619
        %v716 = vunpack.c.l.b16 %v620
        %v717 = vunpack.c.l.b16 %v621
        %v718 = vunpack.c.l.b16 %v622
        %v719 = vunpack.c.l.b16 %v623
        %v720 = vunpack.c.l.b16 %v624
        %v721 = vpack.c.b16 %v674, %v673
        %v722 = vpack.c.b16 %v676, %v675
        %v723 = vpack.c.b16 %v678, %v677
        %v724 = vpack.c.b16 %v680, %v679
        %v725 = vpack.c.b16 %v682, %v681
        %v726 = vpack.c.b16 %v684, %v683
        %v727 = vpack.c.b16 %v686, %v685
        %v728 = vpack.c.b16 %v688, %v687
        %v729 = vpack.c.b16 %v690, %v689
        %v730 = vpack.c.b16 %v692, %v691
        %v731 = vpack.c.b16 %v694, %v693
        %v732 = vpack.c.b16 %v696, %v695
        %v733 = vpack.c.b16 %v698, %v697
        %v734 = vpack.c.b16 %v700, %v699
        %v735 = vpack.c.b16 %v702, %v701
        %v736 = vpack.c.b16 %v704, %v703
        %v737 = vpack.c.b16 %v706, %v705
        %v738 = vpack.c.b16 %v708, %v707
        %v739 = vpack.c.b16 %v710, %v709
        %v740 = vpack.c.b16 %v712, %v711
        %v741 = vpack.c.b16 %v714, %v713
        %v742 = vpack.c.b16 %v716, %v715
        %v743 = vpack.c.b16 %v718, %v717
        %v744 = vpack.c.b16 %v720, %v719
        %769 = vmatpush.bf16.msra.mxu0 %v728
        %770 = vmatpush.bf16.msra.mxu0 %v727
        %771 = vmatpush.bf16.msra.mxu0 %v726
        %772 = vmatpush.bf16.msra.mxu0 %v725
        %773 = vmatpush.bf16.msra.mxu0 %v724
        %774 = vmatpush.bf16.msra.mxu0 %v723
        %775 = vmatpush.bf16.msra.mxu0 %v722
        %776 = vmatpush.bf16.msra.mxu0 %v721
        %777 = vmatmul.bf16.gmra.mxu0 %v574
        %v778 = vpop.f32.mrf.mxu0
        %v779 = vadd.f32 0.0, %v778
        %v780 = vpop.f32.mrf.mxu0
        %v781 = vadd.f32 0.0, %v780
        %782 = vdwg.mxu0
        %783 = vmatpush.bf16.msra.mxu0 %v736
        %784 = vmatpush.bf16.msra.mxu0 %v735
        %785 = vmatpush.bf16.msra.mxu0 %v734
        %786 = vmatpush.bf16.msra.mxu0 %v733
        %787 = vmatpush.bf16.msra.mxu0 %v732
        %788 = vmatpush.bf16.msra.mxu0 %v731
        %789 = vmatpush.bf16.msra.mxu0 %v730
        %790 = vmatpush.bf16.msra.mxu0 %v729
        %791 = vmatmul.bf16.gmra.mxu0 %v575
        %v792 = vpop.f32.mrf.mxu0
        %v793 = vadd.f32 %v779, %v792
        %v794 = vpop.f32.mrf.mxu0
        %v795 = vadd.f32 %v781, %v794
        %796 = vdwg.mxu0
        %797 = vmatpush.bf16.msra.mxu0 %v744
        %798 = vmatpush.bf16.msra.mxu0 %v743
        %799 = vmatpush.bf16.msra.mxu0 %v742
        %800 = vmatpush.bf16.msra.mxu0 %v741
        %801 = vmatpush.bf16.msra.mxu0 %v740
        %802 = vmatpush.bf16.msra.mxu0 %v739
        %803 = vmatpush.bf16.msra.mxu0 %v738
        %804 = vmatpush.bf16.msra.mxu0 %v737
        %805 = vmatmul.bf16.gmra.mxu0 %v576
        %v806 = vpop.f32.mrf.mxu0
        %v807 = vadd.f32 %v793, %v806
        %v808 = vpop.f32.mrf.mxu0
        %v809 = vadd.f32 %v795, %v808
        %810 = vdwg.mxu0
        %v811 = vpack.c.bf16 %v807, %v807
        %v812 = vpack.c.bf16 %v809, %v809
        %813 = vst [vmem:[%s331] sm:$0xf] %v811
        %814 = vst [vmem:[%s331 + $0x4] sm:$0xf] %v812
        %s815 = sand.u32 %s185, 1
        %s816 = scalar_lea.sflag [#allocation4], %s815
        %s817 = sand.u32 %s185, 1
        %s818 = smul.addr %s817, 8
        %s819 = scalar_lea.vmem [#allocation8], %s818
        // Predicated region
        $region61: #{tpu_custom_call.1} parent=47 // pred_check
          %p820 = pneg %p195
        $region62: #{tpu_custom_call.1} parent=47 // pred_check_branch
          %822 = sbr.rel (%p820) target = $region64
        $region63: #{tpu_custom_call.1} parent=47 // pred_region
          %824 = vsyncadd %s816, 0
          %s825 = smul.addr %s25, 2
          %s826 = smul.addr %s825, 4
          %s827 = scalar_lea.hbm %s7, %s826
          %s828 = sshll.u32 %s819, 4
          %s829 = int_to_ptr.vmem [resolvable:$true] %s828
          %s830 = sshll.u32 %s827, 4
          %s831 = int_to_ptr.hbm [resolvable:$true] %s830
          %836 = dma.vmem_to_hbm [thread:$0]  %s829, 128, %s831, %s816, 64, 64, 4
        $region64: #{tpu_custom_call.1} parent=47 // pred_fallthru
          _
      $region48: #{tpu_custom_call.1} parent=5 // pred_fallthru
        _
      %p837 = scmp.le.s32.totalorder 2, %s20
      // Predicated region
      $region65: #{tpu_custom_call.1} parent=5 // pred_check
        %p838 = pneg %p837
      $region66: #{tpu_custom_call.1} parent=5 // pred_check_branch
        %840 = sbr.rel (%p838) target = $region68
      $region67: #{tpu_custom_call.1} parent=5 // pred_region
        %s841 = ssub.s32 %s20, 2
        // Predicated region
        $region69: #{tpu_custom_call.1} parent=67 // pred_check
          %p842 = pneg %p201
        $region70: #{tpu_custom_call.1} parent=67 // pred_check_branch
          %844 = sbr.rel (%p842) target = $region72
        $region71: #{tpu_custom_call.1} parent=67 // pred_region
          %s845 = sand.u32 %s186, 1
          %s846 = scalar_lea.sflag [#allocation4], %s845
          %s847 = sand.u32 %s186, 1
          %s848 = smul.addr %s847, 8
          %s849 = scalar_lea.vmem [#allocation8], %s848
          %851 = dma.done %s846, 128
        $region72: #{tpu_custom_call.1} parent=67 // pred_fallthru
          _
      $region68: #{tpu_custom_call.1} parent=5 // pred_fallthru
        _
    $region6: #{tpu_custom_call.1} parent=1 // loop_footer
      %s24 = sadd.s32 1, %s20
    $region7: #{tpu_custom_call.1} parent=1 // loop_footer_branch
      %19 = sbr.rel target = $region3
    $region8: #{tpu_custom_call.1} parent=1 // loop_exit
      _
    %852 = vsyncpa [#allocation3], 1
    %s853 = scalar_lea.sflag [#allocation3], 1
    %854 = vsyncpa %s853, 1
    %855 = vsyncpa [#allocation6], 1
    %856 = vsyncpa [#allocation4], 1
    %s857 = scalar_lea.sflag [#allocation4], 1
    %858 = vsyncpa %s857, 1

</llo_original>
